<compile_context>
chip_gen: v7x
topology: tpu7x:2x2x1
jax: 0.10.0
libtpu: 0.0.40
codegen_flags: <defaults>
</compile_context>

<pallas_src>
import functools

import jax
import jax.numpy as jnp
from jax.experimental import pallas as pl
from jax.experimental.pallas import tpu as pltpu

# Model dimensions (consistent with the module's layer stack).
D_IN, HID, EMB = 32, 64, 32
HALF = EMB // 2            # 16 -> z dimension

# Packed, lane-dense output slab layout (width = 2 x 128 lanes).
SLAB = 256
_H1_OFF = 0                # [  0,  64)  skip 1 (layer-1 output)
_H2_OFF = 64               # [ 64, 128)  skip 2 (layer-2 output)
_H3_OFF = 128              # [128, 160)  layer-3 output = [mu | logvar]
_Z_OFF = 160               # [160, 176)  z = mu + eps * exp(0.5 * logvar)
_PAD = SLAB - _Z_OFF - HALF  # 80 zero lanes; always written (no stale VMEM)


def _round_up(n, m):
    return (n + m - 1) // m * m


def _encoder_kernel(x_ref, w1_ref, b1_ref, w2_ref, b2_ref, w3_ref, b3_ref,
                    eps_ref, o_ref):
    x = x_ref[...]                                       # [TB, 32] f32

    # Layer 1: Linear(32->64) + ReLU.  f32 operands, f32 accumulate (MXU),
    # bias + ReLU on the VPU in f32 (v5e has no bf16 VPU/EUP path).
    h1 = jnp.dot(x, w1_ref[...], preferred_element_type=jnp.float32) + b1_ref[...]
    h1 = jnp.maximum(h1, 0.0)

    # Layer 2: Linear(64->64) + ReLU.
    h2 = jnp.dot(h1, w2_ref[...], preferred_element_type=jnp.float32) + b2_ref[...]
    h2 = jnp.maximum(h2, 0.0)

    # Layer 3: Linear(64->32) -> [mu | logvar] in a single MXU issue.
    h3 = jnp.dot(h2, w3_ref[...], preferred_element_type=jnp.float32) + b3_ref[...]

    # Reparameterisation: z = mu + eps * exp(0.5 * logvar).
    # Sub-lane-tile slices are XLU lane work (idle slot here); exp -> EUP slot.
    mu = h3[:, :HALF]
    lv = h3[:, HALF:]
    z = mu + eps_ref[...] * jnp.exp(0.5 * lv)

    # Pack everything into one lane-dense [TB, 256] slab as two 128-lane
    # pieces, then a single unmasked store.
    left = jnp.concatenate([h1, h2], axis=-1)                        # lanes [0,128)
    pad = jnp.zeros((x.shape[0], _PAD), dtype=jnp.float32)
    right = jnp.concatenate([h3, z, pad], axis=-1)                   # lanes [128,256)
    o_ref[...] = jnp.concatenate([left, right], axis=-1)


def encoder_forward(x, params, eps, *, block_b=512):
    """Fused EncoderBase.forward (variational=True, return_skips=True).

    Returns (embedding, z, skip_list) exactly like the PyTorch module.
    """
    (w1, b1), (w2, b2), (w3, b3) = params
    x_f32 = x.astype(jnp.float32)                        # x = x.float()
    eps_f32 = eps.astype(jnp.float32)

    n = x_f32.shape[0]
    # Batch tile: multiple of 8 sublanes, capped by the requested block size.
    tb = max(8, min(block_b, _round_up(n, 8)))
    assert tb % 8 == 0, "batch tile must be a multiple of 8 sublanes"
    n_pad = _round_up(n, tb)
    if n_pad != n:
        x_f32 = jnp.pad(x_f32, ((0, n_pad - n), (0, 0)))
        eps_f32 = jnp.pad(eps_f32, ((0, n_pad - n), (0, 0)))

    grid = (n_pad // tb,)

    cost = pl.CostEstimate(
        flops=2 * n_pad * (D_IN * HID + HID * HID + HID * EMB),
        transcendentals=n_pad * HALF,
        bytes_accessed=4 * (n_pad * (D_IN + HALF + SLAB)
                            + w1.size + b1.size + w2.size + b2.size
                            + w3.size + b3.size),
    )

    # Activations / eps / output tiled along the batch axis; weights & biases
    # are whole-array blocks whose index_map is constant (0, 0) -> they stay
    # resident in VMEM for the entire grid.
    def resident(shape):
        return pl.BlockSpec(shape, lambda i: (0, 0))

    def batched(width):
        return pl.BlockSpec((tb, width), lambda i: (i, 0))

    slab = pl.pallas_call(
        _encoder_kernel,
        out_shape=jax.ShapeDtypeStruct((n_pad, SLAB), jnp.float32),
        grid=grid,
        in_specs=[
            batched(D_IN),                               # x
            resident((D_IN, HID)), resident((1, HID)),   # w1, b1
            resident((HID, HID)), resident((1, HID)),    # w2, b2
            resident((HID, EMB)), resident((1, EMB)),    # w3, b3
            batched(HALF),                               # eps
        ],
        out_specs=batched(SLAB),
        compiler_params=pltpu.CompilerParams(
            dimension_semantics=("parallel",)),
        cost_estimate=cost,
    )(x_f32, w1, b1, w2, b2, w3, b3, eps_f32)

    h1 = slab[:n, _H1_OFF:_H1_OFF + HID]
    h2 = slab[:n, _H2_OFF:_H2_OFF + HID]
    h3 = slab[:n, _H3_OFF:_H3_OFF + EMB]                 # [mu | logvar]
    z = slab[:n, _Z_OFF:_Z_OFF + HALF]

    skip_list = [x_f32[:n], h1, h2, h3]
    return h3, z, skip_list


if __name__ == "__main__":
    key = jax.random.PRNGKey(0)
    k_x, k_w0, k_w1, k_w2, k_b2, k_eps = jax.random.split(key, 6)

    B = 16                     # small demo batch; TB=8 -> 2 pipelined grid steps
    x = jax.random.normal(k_x, (B, D_IN), dtype=jnp.float32)

    params = [
        (0.1 * jax.random.normal(k_w0, (D_IN, HID), dtype=jnp.float32),
         jnp.zeros((1, HID), dtype=jnp.float32)),
        (0.1 * jax.random.normal(k_w1, (HID, HID), dtype=jnp.float32),
         jnp.zeros((1, HID), dtype=jnp.float32)),
        (0.1 * jax.random.normal(k_w2, (HID, EMB), dtype=jnp.float32),
         0.01 * jax.random.normal(k_b2, (1, EMB), dtype=jnp.float32)),
    ]
    eps = jax.random.normal(k_eps, (B, HALF), dtype=jnp.float32)

    fwd = jax.jit(functools.partial(encoder_forward, block_b=8))
    h, z, skips = fwd(x, params, eps)
    jax.block_until_ready(h)
    jax.block_until_ready(z)
    jax.block_until_ready(skips)

    # True float32 reference (honours the module's x.float() contract).
    def ref_forward(x, params, eps):
        (w1, b1), (w2, b2), (w3, b3) = params
        a1 = jnp.maximum(jnp.dot(x, w1) + b1, 0.0)
        a2 = jnp.maximum(jnp.dot(a1, w2) + b2, 0.0)
        a3 = jnp.dot(a2, w3) + b3
        zz = a3[:, :HALF] + eps * jnp.exp(0.5 * a3[:, HALF:])
        return a3, zz, [x, a1, a2, a3]

    rh, rz, rskips = ref_forward(x, params, eps)

    # Both paths feed f32 operands; the tolerance only absorbs possible MXU
    # pass-count differences between the Mosaic and XLA f32 matmul lowerings.
    ATOL = RTOL = 2e-2

    assert h.shape == (B, EMB) and z.shape == (B, HALF)
    assert len(skips) == len(params) + 1
    assert jnp.allclose(h, rh, atol=ATOL, rtol=RTOL)
    assert jnp.allclose(z, rz, atol=ATOL, rtol=RTOL)
    for s, rs in zip(skips, rskips):
        assert s.shape == rs.shape
        assert jnp.allclose(s, rs, atol=ATOL, rtol=RTOL)

    print("KERNEL_OK")
</pallas_src>

<mosaic_0001>
module attributes {stable_mosaic.version = 11 : i64} {
  func.func @_encoder_kernel(%arg0: i32, %arg1: memref<8x32xf32, #tpu.memory_space<vmem>>, %arg2: memref<32x64xf32, #tpu.memory_space<vmem>>, %arg3: memref<1x64xf32, #tpu.memory_space<vmem>>, %arg4: memref<64x64xf32, #tpu.memory_space<vmem>>, %arg5: memref<1x64xf32, #tpu.memory_space<vmem>>, %arg6: memref<64x32xf32, #tpu.memory_space<vmem>>, %arg7: memref<1x32xf32, #tpu.memory_space<vmem>>, %arg8: memref<8x16xf32, #tpu.memory_space<vmem>>, %arg9: memref<8x256xf32, #tpu.memory_space<vmem>>) attributes {dimension_semantics = [#tpu.dimension_semantics<parallel>], iteration_bounds = array<i64: 2>, scalar_prefetch = 0 : i64, scratch_operands = 0 : i64, tpu.core_type = #tpu.core_type<tc>, window_params = [{transform_indices = @transform_0, window_bounds = array<i64: 8, 32>}, {pipeline_mode = #tpu.pipeline_mode<synchronous>, transform_indices = @transform_1, window_bounds = array<i64: 32, 64>}, {pipeline_mode = #tpu.pipeline_mode<synchronous>, transform_indices = @transform_2, window_bounds = array<i64: 1, 64>}, {pipeline_mode = #tpu.pipeline_mode<synchronous>, transform_indices = @transform_3, window_bounds = array<i64: 64, 64>}, {pipeline_mode = #tpu.pipeline_mode<synchronous>, transform_indices = @transform_4, window_bounds = array<i64: 1, 64>}, {pipeline_mode = #tpu.pipeline_mode<synchronous>, transform_indices = @transform_5, window_bounds = array<i64: 64, 32>}, {pipeline_mode = #tpu.pipeline_mode<synchronous>, transform_indices = @transform_6, window_bounds = array<i64: 1, 32>}, {transform_indices = @transform_7, window_bounds = array<i64: 8, 16>}, {transform_indices = @transform_8, window_bounds = array<i64: 8, 256>}]} {
    %c0 = arith.constant 0 : index
    %c0_0 = arith.constant 0 : index
    %0 = vector.load %arg1[%c0, %c0_0] : memref<8x32xf32, #tpu.memory_space<vmem>>, vector<8x32xf32>
    %c0_1 = arith.constant 0 : index
    %c0_2 = arith.constant 0 : index
    %1 = vector.load %arg2[%c0_1, %c0_2] : memref<32x64xf32, #tpu.memory_space<vmem>>, vector<32x64xf32>
    %cst = arith.constant dense<0.000000e+00> : vector<8x64xf32>
    %2 = tpu.matmul %0, %1, %cst {dimension_numbers = #tpu.dot_dimension_numbers<[1], [0], [0], [1], [0, 0, 1, 1], [], []>} : vector<8x32xf32>, vector<32x64xf32>, vector<8x64xf32> -> vector<8x64xf32>
    %c0_3 = arith.constant 0 : index
    %c0_4 = arith.constant 0 : index
    %3 = vector.load %arg3[%c0_3, %c0_4] : memref<1x64xf32, #tpu.memory_space<vmem>>, vector<1x64xf32>
    %4 = vector.broadcast %3 : vector<1x64xf32> to vector<8x64xf32>
    %5 = arith.addf %2, %4 : vector<8x64xf32>
    %cst_5 = arith.constant 0.000000e+00 : f32
    %6 = vector.broadcast %cst_5 : f32 to vector<8x64xf32>
    %7 = arith.maximumf %5, %6 : vector<8x64xf32>
    %c0_6 = arith.constant 0 : index
    %c0_7 = arith.constant 0 : index
    %8 = vector.load %arg4[%c0_6, %c0_7] : memref<64x64xf32, #tpu.memory_space<vmem>>, vector<64x64xf32>
    %cst_8 = arith.constant dense<0.000000e+00> : vector<8x64xf32>
    %9 = tpu.matmul %7, %8, %cst_8 {dimension_numbers = #tpu.dot_dimension_numbers<[1], [0], [0], [1], [0, 0, 1, 1], [], []>} : vector<8x64xf32>, vector<64x64xf32>, vector<8x64xf32> -> vector<8x64xf32>
    %c0_9 = arith.constant 0 : index
    %c0_10 = arith.constant 0 : index
    %10 = vector.load %arg5[%c0_9, %c0_10] : memref<1x64xf32, #tpu.memory_space<vmem>>, vector<1x64xf32>
    %11 = vector.broadcast %10 : vector<1x64xf32> to vector<8x64xf32>
    %12 = arith.addf %9, %11 : vector<8x64xf32>
    %cst_11 = arith.constant 0.000000e+00 : f32
    %13 = vector.broadcast %cst_11 : f32 to vector<8x64xf32>
    %14 = arith.maximumf %12, %13 : vector<8x64xf32>
    %c0_12 = arith.constant 0 : index
    %c0_13 = arith.constant 0 : index
    %15 = vector.load %arg6[%c0_12, %c0_13] : memref<64x32xf32, #tpu.memory_space<vmem>>, vector<64x32xf32>
    %cst_14 = arith.constant dense<0.000000e+00> : vector<8x32xf32>
    %16 = tpu.matmul %14, %15, %cst_14 {dimension_numbers = #tpu.dot_dimension_numbers<[1], [0], [0], [1], [0, 0, 1, 1], [], []>} : vector<8x64xf32>, vector<64x32xf32>, vector<8x32xf32> -> vector<8x32xf32>
    %c0_15 = arith.constant 0 : index
    %c0_16 = arith.constant 0 : index
    %17 = vector.load %arg7[%c0_15, %c0_16] : memref<1x32xf32, #tpu.memory_space<vmem>>, vector<1x32xf32>
    %18 = vector.broadcast %17 : vector<1x32xf32> to vector<8x32xf32>
    %19 = arith.addf %16, %18 : vector<8x32xf32>
    %20 = vector.extract_strided_slice %19 {offsets = [0, 0], sizes = [8, 16], strides = [1, 1]} : vector<8x32xf32> to vector<8x16xf32>
    %21 = vector.extract_strided_slice %19 {offsets = [0, 16], sizes = [8, 16], strides = [1, 1]} : vector<8x32xf32> to vector<8x16xf32>
    %c0_17 = arith.constant 0 : index
    %c0_18 = arith.constant 0 : index
    %22 = vector.load %arg8[%c0_17, %c0_18] : memref<8x16xf32, #tpu.memory_space<vmem>>, vector<8x16xf32>
    %cst_19 = arith.constant 5.000000e-01 : f32
    %23 = vector.broadcast %cst_19 : f32 to vector<8x16xf32>
    %24 = arith.mulf %23, %21 : vector<8x16xf32>
    %25 = math.exp %24 : vector<8x16xf32>
    %26 = arith.mulf %22, %25 : vector<8x16xf32>
    %27 = arith.addf %20, %26 : vector<8x16xf32>
    %28 = tpu.concatenate %7, %14 in 1 : vector<8x64xf32>, vector<8x64xf32> -> vector<8x128xf32>
    %cst_20 = arith.constant 0.000000e+00 : f32
    %29 = vector.broadcast %cst_20 : f32 to vector<8x80xf32>
    %30 = tpu.concatenate %19, %27, %29 in 1 : vector<8x32xf32>, vector<8x16xf32>, vector<8x80xf32> -> vector<8x128xf32>
    %31 = tpu.concatenate %28, %30 in 1 : vector<8x128xf32>, vector<8x128xf32> -> vector<8x256xf32>
    %c0_21 = arith.constant 0 : index
    %c0_22 = arith.constant 0 : index
    %32 = vector.load %arg9[%c0_21, %c0_22] : memref<8x256xf32, #tpu.memory_space<vmem>>, vector<8x256xf32>
    tpu.vector_store %arg9[%c0_21, %c0_22], %31 {strides = array<i32>} : memref<8x256xf32, #tpu.memory_space<vmem>>, vector<8x256xf32>,
    return
  }
  func.func @transform_0(%arg0: i32) -> (i32, i32) {
    %c0_i32 = arith.constant 0 : i32
    %c0_i32_0 = arith.constant 0 : i32
    return %arg0, %c0_i32 : i32, i32
  }
  func.func @transform_1(%arg0: i32) -> (i32, i32) {
    %c0_i32 = arith.constant 0 : i32
    %c0_i32_0 = arith.constant 0 : i32
    %c0_i32_1 = arith.constant 0 : i32
    return %c0_i32, %c0_i32_0 : i32, i32
  }
  func.func @transform_2(%arg0: i32) -> (i32, i32) {
    %c0_i32 = arith.constant 0 : i32
    %c0_i32_0 = arith.constant 0 : i32
    %c0_i32_1 = arith.constant 0 : i32
    return %c0_i32, %c0_i32_0 : i32, i32
  }
  func.func @transform_3(%arg0: i32) -> (i32, i32) {
    %c0_i32 = arith.constant 0 : i32
    %c0_i32_0 = arith.constant 0 : i32
    %c0_i32_1 = arith.constant 0 : i32
    return %c0_i32, %c0_i32_0 : i32, i32
  }
  func.func @transform_4(%arg0: i32) -> (i32, i32) {
    %c0_i32 = arith.constant 0 : i32
    %c0_i32_0 = arith.constant 0 : i32
    %c0_i32_1 = arith.constant 0 : i32
    return %c0_i32, %c0_i32_0 : i32, i32
  }
  func.func @transform_5(%arg0: i32) -> (i32, i32) {
    %c0_i32 = arith.constant 0 : i32
    %c0_i32_0 = arith.constant 0 : i32
    %c0_i32_1 = arith.constant 0 : i32
    return %c0_i32, %c0_i32_0 : i32, i32
  }
  func.func @transform_6(%arg0: i32) -> (i32, i32) {
    %c0_i32 = arith.constant 0 : i32
    %c0_i32_0 = arith.constant 0 : i32
    %c0_i32_1 = arith.constant 0 : i32
    return %c0_i32, %c0_i32_0 : i32, i32
  }
  func.func @transform_7(%arg0: i32) -> (i32, i32) {
    %c0_i32 = arith.constant 0 : i32
    %c0_i32_0 = arith.constant 0 : i32
    return %arg0, %c0_i32 : i32, i32
  }
  func.func @transform_8(%arg0: i32) -> (i32, i32) {
    %c0_i32 = arith.constant 0 : i32
    %c0_i32_0 = arith.constant 0 : i32
    return %arg0, %c0_i32 : i32, i32
  }
}

</mosaic_0001>

<llo_original>
// kernel: encoder_forward.1
$region0: #{encoder_forward.1}
  #allocation0 [shape = 'u32[]', space=smem, size = 0x4, offset = 0x4, fixed_abs, tag = 'smem constant byte address 0x4 - core index']
  #allocation1 [shape = 'u32[144,128]{1,0:T(1,128)}', space=vmem, size = 0x12000, scoped, tag = 'internal scratch']
  %s0 = inlined_call_operand.vmem [shape: f32[16,32], index: 0, kind: input, shape index: {}]
  %s1 = inlined_call_operand.vmem [shape: f32[32,64], index: 1, kind: input, shape index: {}]
  %s2 = inlined_call_operand.vmem [shape: f32[1,64], index: 2, kind: input, shape index: {}]
  %s3 = inlined_call_operand.vmem [shape: f32[64,64], index: 3, kind: input, shape index: {}]
  %s4 = inlined_call_operand.vmem [shape: f32[1,64], index: 4, kind: input, shape index: {}]
  %s5 = inlined_call_operand.vmem [shape: f32[64,32], index: 5, kind: input, shape index: {}]
  %s6 = inlined_call_operand.hbm [shape: f32[1,32], index: 6, kind: input, shape index: {}]
  %s7 = inlined_call_operand.hbm [shape: f32[16,16], index: 7, kind: input, shape index: {}]
  %s8 = inlined_call_operand.vmem [shape: f32[16,256], index: 8, kind: output, shape index: {}]
  %s9 = sld [smem:[#allocation0]]
  $region73: #{encoder_forward.1} parent=0
    _
  %s11 = ssub.s32 1, %s9
  %s12 = scalar_select 0, %s11, %s9
  $region1: #{encoder_forward.1} parent=0
    #allocation2 [shape = 'u8[512]{0}', space=vmem, size = 0x400, scoped, tag = 'input window, operand 6, single buffered']
    #allocation3 [shape = 's32[2]{0}', space=sflag, size = 0x8, scoped, tag = 'scoped memory for encoder_forward.1']
    #allocation4 [shape = 'u8[8192]{0}', space=vmem, size = 0x2000, scoped, tag = 'input window, operand 7']
    #allocation5 [shape = 's32[2]{0}', space=sflag, size = 0x8, scoped, tag = 'scoped memory for encoder_forward.1']
    %13 = vsyncpa [#allocation3], 0
    %14 = vsyncpa [#allocation5], 0
    %s15 = scalar_lea.sflag [#allocation5], 1
    %16 = vsyncpa %s15, 0
    loop: start=0, step=1, limit=4
    $region2: #{encoder_forward.1} parent=1 // loop_pre_header
      _
    $region3: #{encoder_forward.1} parent=1 // loop_header
      %s18 = sphi 0, %s22
      %p19 = scmp.ge.s32.totalorder %s18, 4
      %s28 = sphi 0, %s30
      %s31 = sphi 0, %s28
      %s32 = sphi 0, %s31
      %s48 = sphi 0, %s32
      %s52 = sphi 0, %s52
      %s54 = sphi 0, %s52
      %s55 = sphi 0, %s54
      %s69 = sphi 0, %s55
      %s73 = sphi 0, %s73
      %s75 = sphi 0, %s73
      %s76 = sphi 0, %s75
      %s90 = sphi 0, %s76
      %s94 = sphi 0, %s94
      %s96 = sphi 0, %s94
      %s97 = sphi 0, %s96
      %s111 = sphi 0, %s97
      %s115 = sphi 0, %s115
      %s117 = sphi 0, %s115
      %s118 = sphi 0, %s117
      %s132 = sphi 0, %s118
      %s136 = sphi 0, %s136
      %s138 = sphi 0, %s136
      %s139 = sphi 0, %s138
      %s153 = sphi 0, %s139
      %s157 = sphi 0, %s157
      %s159 = sphi 0, %s157
      %s160 = sphi 0, %s159
      %s174 = sphi 0, %s160
      %s180 = sphi 0, %s182
      %s183 = sphi 0, %s180
      %s184 = sphi 0, %s183
      %s200 = sphi 0, %s184
      %s206 = sphi 0, %s208
      %s209 = sphi 0, %s206
      %s210 = sphi 0, %s209
      %s226 = sphi 0, %s210
    $region4: #{encoder_forward.1} parent=1 // loop_header_branch
      %21 = sbr.rel (%p19) target = $region8
    $region5: #{encoder_forward.1} parent=1 // loop_body
      %s23 = ssub.s32 %s18, 1
      %s24 = ssub.s32 %s18, 2
      %s25 = sadd.s32 %s18, 1
      %s26 = ssub.s32 %s18, %s25
      %p27 = scmp.eq.s32.totalorder %s26, 0
      %s29 = sadd.s32 %s28, 1
      %s30 = scalar_select %p27, %s28, %s29
      %p33 = pneg %p27
      %p34 = scmp.eq.s32.totalorder %s18, 1
      %p35 = por %p33, %p34
      %p36 = scmp.ne.s32.totalorder %s28, %s31
      %p37 = scmp.eq.s32.totalorder %s18, 0
      %p38 = por %p36, %p37
      %p39 = scmp.ne.s32.totalorder %s28, %s31
      %p40 = scmp.eq.s32.totalorder %s23, 1
      %p41 = por %p39, %p40
      %p42 = scmp.ne.s32.totalorder %s31, %s32
      %p43 = scmp.eq.s32.totalorder %s23, 0
      %p44 = por %p42, %p43
      %p45 = scmp.ne.s32.totalorder %s31, %s32
      %p46 = scmp.eq.s32.totalorder %s24, 1
      %p47 = por %p45, %p46
      %p49 = scmp.ne.s32.totalorder %s32, %s48
      %p50 = scmp.eq.s32.totalorder %s24, 0
      %p51 = por %p49, %p50
      %s53 = sadd.s32 %s52, 1
      %p56 = scmp.eq.s32.totalorder %s18, 1
      %p57 = scmp.ne.s32.totalorder %s52, %s54
      %p58 = scmp.eq.s32.totalorder %s18, 0
      %p59 = por %p57, %p58
      %p60 = scmp.ne.s32.totalorder %s52, %s54
      %p61 = scmp.eq.s32.totalorder %s23, 1
      %p62 = por %p60, %p61
      %p63 = scmp.ne.s32.totalorder %s54, %s55
      %p64 = scmp.eq.s32.totalorder %s23, 0
      %p65 = por %p63, %p64
      %p66 = scmp.ne.s32.totalorder %s54, %s55
      %p67 = scmp.eq.s32.totalorder %s24, 1
      %p68 = por %p66, %p67
      %p70 = scmp.ne.s32.totalorder %s55, %s69
      %p71 = scmp.eq.s32.totalorder %s24, 0
      %p72 = por %p70, %p71
      %s74 = sadd.s32 %s73, 1
      %p77 = scmp.eq.s32.totalorder %s18, 1
      %p78 = scmp.ne.s32.totalorder %s73, %s75
      %p79 = scmp.eq.s32.totalorder %s18, 0
      %p80 = por %p78, %p79
      %p81 = scmp.ne.s32.totalorder %s73, %s75
      %p82 = scmp.eq.s32.totalorder %s23, 1
      %p83 = por %p81, %p82
      %p84 = scmp.ne.s32.totalorder %s75, %s76
      %p85 = scmp.eq.s32.totalorder %s23, 0
      %p86 = por %p84, %p85
      %p87 = scmp.ne.s32.totalorder %s75, %s76
      %p88 = scmp.eq.s32.totalorder %s24, 1
      %p89 = por %p87, %p88
      %p91 = scmp.ne.s32.totalorder %s76, %s90
      %p92 = scmp.eq.s32.totalorder %s24, 0
      %p93 = por %p91, %p92
      %s95 = sadd.s32 %s94, 1
      %p98 = scmp.eq.s32.totalorder %s18, 1
      %p99 = scmp.ne.s32.totalorder %s94, %s96
      %p100 = scmp.eq.s32.totalorder %s18, 0
      %p101 = por %p99, %p100
      %p102 = scmp.ne.s32.totalorder %s94, %s96
      %p103 = scmp.eq.s32.totalorder %s23, 1
      %p104 = por %p102, %p103
      %p105 = scmp.ne.s32.totalorder %s96, %s97
      %p106 = scmp.eq.s32.totalorder %s23, 0
      %p107 = por %p105, %p106
      %p108 = scmp.ne.s32.totalorder %s96, %s97
      %p109 = scmp.eq.s32.totalorder %s24, 1
      %p110 = por %p108, %p109
      %p112 = scmp.ne.s32.totalorder %s97, %s111
      %p113 = scmp.eq.s32.totalorder %s24, 0
      %p114 = por %p112, %p113
      %s116 = sadd.s32 %s115, 1
      %p119 = scmp.eq.s32.totalorder %s18, 1
      %p120 = scmp.ne.s32.totalorder %s115, %s117
      %p121 = scmp.eq.s32.totalorder %s18, 0
      %p122 = por %p120, %p121
      %p123 = scmp.ne.s32.totalorder %s115, %s117
      %p124 = scmp.eq.s32.totalorder %s23, 1
      %p125 = por %p123, %p124
      %p126 = scmp.ne.s32.totalorder %s117, %s118
      %p127 = scmp.eq.s32.totalorder %s23, 0
      %p128 = por %p126, %p127
      %p129 = scmp.ne.s32.totalorder %s117, %s118
      %p130 = scmp.eq.s32.totalorder %s24, 1
      %p131 = por %p129, %p130
      %p133 = scmp.ne.s32.totalorder %s118, %s132
      %p134 = scmp.eq.s32.totalorder %s24, 0
      %p135 = por %p133, %p134
      %s137 = sadd.s32 %s136, 1
      %p140 = scmp.eq.s32.totalorder %s18, 1
      %p141 = scmp.ne.s32.totalorder %s136, %s138
      %p142 = scmp.eq.s32.totalorder %s18, 0
      %p143 = por %p141, %p142
      %p144 = scmp.ne.s32.totalorder %s136, %s138
      %p145 = scmp.eq.s32.totalorder %s23, 1
      %p146 = por %p144, %p145
      %p147 = scmp.ne.s32.totalorder %s138, %s139
      %p148 = scmp.eq.s32.totalorder %s23, 0
      %p149 = por %p147, %p148
      %p150 = scmp.ne.s32.totalorder %s138, %s139
      %p151 = scmp.eq.s32.totalorder %s24, 1
      %p152 = por %p150, %p151
      %p154 = scmp.ne.s32.totalorder %s139, %s153
      %p155 = scmp.eq.s32.totalorder %s24, 0
      %p156 = por %p154, %p155
      %s158 = sadd.s32 %s157, 1
      %p161 = scmp.eq.s32.totalorder %s18, 1
      %p162 = scmp.ne.s32.totalorder %s157, %s159
      %p163 = scmp.eq.s32.totalorder %s18, 0
      %p164 = por %p162, %p163
      %p165 = scmp.ne.s32.totalorder %s157, %s159
      %p166 = scmp.eq.s32.totalorder %s23, 1
      %p167 = por %p165, %p166
      %p168 = scmp.ne.s32.totalorder %s159, %s160
      %p169 = scmp.eq.s32.totalorder %s23, 0
      %p170 = por %p168, %p169
      %p171 = scmp.ne.s32.totalorder %s159, %s160
      %p172 = scmp.eq.s32.totalorder %s24, 1
      %p173 = por %p171, %p172
      %p175 = scmp.ne.s32.totalorder %s160, %s174
      %p176 = scmp.eq.s32.totalorder %s24, 0
      %p177 = por %p175, %p176
      %s178 = ssub.s32 %s18, %s25
      %p179 = scmp.eq.s32.totalorder %s178, 0
      %s181 = sadd.s32 %s180, 1
      %s182 = scalar_select %p179, %s180, %s181
      %p185 = pneg %p179
      %p186 = scmp.eq.s32.totalorder %s18, 1
      %p187 = por %p185, %p186
      %p188 = scmp.ne.s32.totalorder %s180, %s183
      %p189 = scmp.eq.s32.totalorder %s18, 0
      %p190 = por %p188, %p189
      %p191 = scmp.ne.s32.totalorder %s180, %s183
      %p192 = scmp.eq.s32.totalorder %s23, 1
      %p193 = por %p191, %p192
      %p194 = scmp.ne.s32.totalorder %s183, %s184
      %p195 = scmp.eq.s32.totalorder %s23, 0
      %p196 = por %p194, %p195
      %p197 = scmp.ne.s32.totalorder %s183, %s184
      %p198 = scmp.eq.s32.totalorder %s24, 1
      %p199 = por %p197, %p198
      %p201 = scmp.ne.s32.totalorder %s184, %s200
      %p202 = scmp.eq.s32.totalorder %s24, 0
      %p203 = por %p201, %p202
      %s204 = ssub.s32 %s18, %s25
      %p205 = scmp.eq.s32.totalorder %s204, 0
      %s207 = sadd.s32 %s206, 1
      %s208 = scalar_select %p205, %s206, %s207
      %p211 = pneg %p205
      %p212 = scmp.eq.s32.totalorder %s18, 1
      %p213 = por %p211, %p212
      %p214 = scmp.ne.s32.totalorder %s206, %s209
      %p215 = scmp.eq.s32.totalorder %s18, 0
      %p216 = por %p214, %p215
      %p217 = scmp.ne.s32.totalorder %s206, %s209
      %p218 = scmp.eq.s32.totalorder %s23, 1
      %p219 = por %p217, %p218
      %p220 = scmp.ne.s32.totalorder %s209, %s210
      %p221 = scmp.eq.s32.totalorder %s23, 0
      %p222 = por %p220, %p221
      %p223 = scmp.ne.s32.totalorder %s209, %s210
      %p224 = scmp.eq.s32.totalorder %s24, 1
      %p225 = por %p223, %p224
      %p227 = scmp.ne.s32.totalorder %s210, %s226
      %p228 = scmp.eq.s32.totalorder %s24, 0
      %p229 = por %p227, %p228
      %p230 = scmp.le.s32.totalorder 1, %s18
      %p231 = scmp.lt.s32.totalorder %s18, 3
      %p232 = pnand %p230, %p231
      %p233 = pneg %p232
      // Predicated region
      $region9: #{encoder_forward.1} parent=5 // pred_check
        _
      $region10: #{encoder_forward.1} parent=5 // pred_check_branch
        %235 = sbr.rel (%p232) target = $region12
      $region11: #{encoder_forward.1} parent=5 // pred_region
        %s236 = ssub.s32 %s18, 1
        // Predicated region
        $region13: #{encoder_forward.1} parent=11 // pred_check
          %p237 = pneg %p65
        $region14: #{encoder_forward.1} parent=11 // pred_check_branch
          %239 = sbr.rel (%p237) target = $region16
        $region15: #{encoder_forward.1} parent=11 // pred_region
          _
        $region16: #{encoder_forward.1} parent=11 // pred_fallthru
          _
        // Predicated region
        $region17: #{encoder_forward.1} parent=11 // pred_check
          %p240 = pneg %p86
        $region18: #{encoder_forward.1} parent=11 // pred_check_branch
          %242 = sbr.rel (%p240) target = $region20
        $region19: #{encoder_forward.1} parent=11 // pred_region
          _
        $region20: #{encoder_forward.1} parent=11 // pred_fallthru
          _
        // Predicated region
        $region21: #{encoder_forward.1} parent=11 // pred_check
          %p243 = pneg %p107
        $region22: #{encoder_forward.1} parent=11 // pred_check_branch
          %245 = sbr.rel (%p243) target = $region24
        $region23: #{encoder_forward.1} parent=11 // pred_region
          _
        $region24: #{encoder_forward.1} parent=11 // pred_fallthru
          _
        // Predicated region
        $region25: #{encoder_forward.1} parent=11 // pred_check
          %p246 = pneg %p128
        $region26: #{encoder_forward.1} parent=11 // pred_check_branch
          %248 = sbr.rel (%p246) target = $region28
        $region27: #{encoder_forward.1} parent=11 // pred_region
          _
        $region28: #{encoder_forward.1} parent=11 // pred_fallthru
          _
        // Predicated region
        $region29: #{encoder_forward.1} parent=11 // pred_check
          %p249 = pneg %p149
        $region30: #{encoder_forward.1} parent=11 // pred_check_branch
          %251 = sbr.rel (%p249) target = $region32
        $region31: #{encoder_forward.1} parent=11 // pred_region
          _
        $region32: #{encoder_forward.1} parent=11 // pred_fallthru
          _
        // Predicated region
        $region33: #{encoder_forward.1} parent=11 // pred_check
          %p252 = pneg %p170
        $region34: #{encoder_forward.1} parent=11 // pred_check_branch
          %254 = sbr.rel (%p252) target = $region36
        $region35: #{encoder_forward.1} parent=11 // pred_region
          %s256 = ssub.s32 16, 16
          %257 = vsyncadd [#allocation3], %s256
          %s259 = sshll.u32 [#allocation2], 4
          %s260 = int_to_ptr.vmem [resolvable:$true] %s259
          %262 = dma.hbm_to_vmem [thread:$0]  %s6, 16, %s260, [#allocation3]
        $region36: #{encoder_forward.1} parent=11 // pred_fallthru
          _
      $region12: #{encoder_forward.1} parent=5 // pred_fallthru
        _
      %p263 = scmp.lt.s32.totalorder %s18, 2
      // Predicated region
      $region37: #{encoder_forward.1} parent=5 // pred_check
        %p264 = pneg %p263
      $region38: #{encoder_forward.1} parent=5 // pred_check_branch
        %266 = sbr.rel (%p264) target = $region40
      $region39: #{encoder_forward.1} parent=5 // pred_region
        // Predicated region
        $region41: #{encoder_forward.1} parent=39 // pred_check
          %p267 = pneg %p38
        $region42: #{encoder_forward.1} parent=39 // pred_check_branch
          %269 = sbr.rel (%p267) target = $region44
        $region43: #{encoder_forward.1} parent=39 // pred_region
          %p270 = scmp.lt.s32.totalorder %s18, 1
          %s271 = scalar_select %p270, %s18, 1
          %s272 = smul.addr %s271, 8
          %s273 = scalar_lea.vmem %s0, %s272
        $region44: #{encoder_forward.1} parent=39 // pred_fallthru
          _
        // Predicated region
        $region45: #{encoder_forward.1} parent=39 // pred_check
          %p274 = pneg %p190
        $region46: #{encoder_forward.1} parent=39 // pred_check_branch
          %276 = sbr.rel (%p274) target = $region48
        $region47: #{encoder_forward.1} parent=39 // pred_region
          %s277 = sand.u32 %s180, 1
          %s278 = scalar_lea.sflag [#allocation5], %s277
          %s279 = sand.u32 %s180, 1
          %s280 = smul.addr %s279, 8
          %s281 = scalar_lea.vmem [#allocation4], %s280
          %s283 = ssub.s32 128, 128
          %284 = vsyncadd %s278, %s283
          %s285 = smul.addr %s18, 128
          %s286 = scalar_lea.hbm %s7, %s285
          %s288 = sshll.u32 %s281, 4
          %s289 = int_to_ptr.vmem [resolvable:$true] %s288
          %291 = dma.hbm_to_vmem [thread:$0]  %s286, 128, %s289, %s278
        $region48: #{encoder_forward.1} parent=39 // pred_fallthru
          _
      $region40: #{encoder_forward.1} parent=5 // pred_fallthru
        _
      %p292 = scmp.le.s32.totalorder 1, %s18
      %p293 = scmp.lt.s32.totalorder %s18, 3
      %p294 = pnand %p292, %p293
      %p295 = pneg %p294
      // Predicated region
      $region49: #{encoder_forward.1} parent=5 // pred_check
        _
      $region50: #{encoder_forward.1} parent=5 // pred_check_branch
        %297 = sbr.rel (%p294) target = $region52
      $region51: #{encoder_forward.1} parent=5 // pred_region
        %s298 = ssub.s32 %s18, 1
        // Predicated region
        $region53: #{encoder_forward.1} parent=51 // pred_check
          %p299 = pneg %p170
        $region54: #{encoder_forward.1} parent=51 // pred_check_branch
          %301 = sbr.rel (%p299) target = $region56
        $region55: #{encoder_forward.1} parent=51 // pred_region
          %302 = dma.done [#allocation3], 16
        $region56: #{encoder_forward.1} parent=51 // pred_fallthru
          _
        %s303 = sand.u32 %s183, 1
        %s304 = scalar_lea.sflag [#allocation5], %s303
        %s305 = sand.u32 %s183, 1
        %s306 = smul.addr %s305, 8
        %s307 = scalar_lea.vmem [#allocation4], %s306
        // Predicated region
        $region57: #{encoder_forward.1} parent=51 // pred_check
          %p308 = pneg %p196
        $region58: #{encoder_forward.1} parent=51 // pred_check_branch
          %310 = sbr.rel (%p308) target = $region60
        $region59: #{encoder_forward.1} parent=51 // pred_region
          %311 = dma.done %s304, 128
        $region60: #{encoder_forward.1} parent=51 // pred_fallthru
          _
        %p312 = scmp.lt.s32.totalorder %s23, 1
        %s313 = scalar_select %p312, %s23, 1
        %s314 = smul.addr %s313, 8
        %s315 = scalar_lea.vmem %s0, %s314
        %p316 = pneg %p44
        %p317 = pneg %p41
        %p318 = pneg %p65
        %p319 = pneg %p62
        %p320 = pneg %p86
        %p321 = pneg %p83
        %p322 = pneg %p107
        %p323 = pneg %p104
        %p324 = pneg %p128
        %p325 = pneg %p125
        %p326 = pneg %p149
        %p327 = pneg %p146
        %p328 = pneg %p170
        %p329 = pneg %p167
        %s330 = sand.u32 %s183, 1
        %s331 = scalar_lea.sflag [#allocation5], %s330
        %s332 = sand.u32 %s183, 1
        %s333 = smul.addr %s332, 8
        %s334 = scalar_lea.vmem [#allocation4], %s333
        %p335 = pneg %p196
        %p336 = pneg %p193
        %p337 = pneg %p222
        %p338 = pneg %p219
        %p339 = scmp.lt.s32.totalorder %s23, 1
        %s340 = scalar_select %p339, %s23, 1
        %s341 = smul.addr %s340, 2
        %s342 = smul.addr %s341, 8
        %s343 = scalar_lea.vmem %s8, %s342
        %p344 = scmp.lt.s32.totalorder %s23, 1
        %s345 = scalar_select %p344, %s23, 1
        %s346 = smul.addr %s345, 8
        %s347 = scalar_lea.vmem %s0, %s346
        %p348 = scmp.lt.s32.totalorder %s23, 1
        %s349 = scalar_select %p348, %s23, 1
        %s350 = smul.addr %s349, 2
        %s351 = smul.addr %s350, 8
        %s352 = scalar_lea.vmem %s8, %s351
        %v353 = vld [vmem:[%s347] sm:$0xff]
        %v354 = vld [vmem:[%s1] sm:$0xff]
        %v355 = vld [vmem:[%s1 + $0x8] sm:$0xff]
        %v356 = vld [vmem:[%s1 + $0x10] sm:$0xff]
        %v357 = vld [vmem:[%s1 + $0x18] sm:$0xff]
        %v358 = vld [vmem:[%s2] sm:$0x1]
        %v360 = vlaneseq
        %v361 = vshrl.u32 %v360, 7
        %v362 = vsub.s32 0, %v361
        %v363 = vrot.slane %v358, %v362
        %vm365 = vcmask 261120
        %v367 = vsel %vm365, %v353, 0
        %369 = vmatprep.subr.mxu0 0.0
        %370 = vmatpush1.msra.mxu0 %v354
        %371 = vmatprep.subr.mxu0 0.0
        %372 = vmatpush1.msra.mxu0 %v355
        %373 = vmatprep.subr.mxu0 0.0
        %374 = vmatpush1.msra.mxu0 %v356
        %375 = vmatprep.subr.mxu0 0.0
        %376 = vmatpush1.msra.mxu0 %v357
        %377 = vmatprep.subr.mxu0 0.0
        %378 = vmatpush1.msra.mxu0 0.0
        %379 = vmatprep.subr.mxu0 0.0
        %380 = vmatpush1.msra.mxu0 0.0
        %381 = vmatprep.subr.mxu0 0.0
        %382 = vmatpush1.msra.mxu0 0.0
        %383 = vmatprep.subr.mxu0 0.0
        %384 = vmatpush1.msra.mxu0 0.0
        %385 = vmatprep.subr.mxu0 0.0
        %386 = vmatpush1.msra.mxu0 0.0
        %387 = vmatprep.subr.mxu0 0.0
        %388 = vmatpush1.msra.mxu0 0.0
        %389 = vmatprep.subr.mxu0 0.0
        %390 = vmatpush1.msra.mxu0 0.0
        %391 = vmatprep.subr.mxu0 0.0
        %392 = vmatpush1.msra.mxu0 0.0
        %393 = vmatprep.subr.mxu0 0.0
        %394 = vmatpush1.msra.mxu0 0.0
        %395 = vmatprep.subr.mxu0 0.0
        %396 = vmatpush1.msra.mxu0 0.0
        %397 = vmatprep.subr.mxu0 0.0
        %398 = vmatpush1.msra.mxu0 0.0
        %399 = vmatprep.subr.mxu0 0.0
        %400 = vmatpush1.msra.mxu0 0.0
        %401 = vmatprep.subr.mxu0 0.0
        %402 = vmatpush1.msra.mxu0 0.0
        %403 = vmatprep.subr.mxu0 0.0
        %404 = vmatpush1.msra.mxu0 0.0
        %405 = vmatprep.subr.mxu0 0.0
        %406 = vmatpush1.msra.mxu0 0.0
        %407 = vmatprep.subr.mxu0 0.0
        %408 = vmatpush1.msra.mxu0 0.0
        %409 = vmatprep.subr.mxu0 0.0
        %410 = vmatpush1.msra.mxu0 0.0
        %411 = vmatprep.subr.mxu0 0.0
        %412 = vmatpush1.msra.mxu0 0.0
        %413 = vmatprep.subr.mxu0 0.0
        %414 = vmatpush1.msra.mxu0 0.0
        %415 = vmatprep.subr.mxu0 0.0
        %416 = vmatpush1.msra.mxu0 0.0
        %417 = vmatprep.subr.mxu0 0.0
        %418 = vmatpush1.msra.mxu0 0.0
        %419 = vmatprep.subr.mxu0 0.0
        %420 = vmatpush1.msra.mxu0 0.0
        %421 = vmatprep.subr.mxu0 0.0
        %422 = vmatpush1.msra.mxu0 0.0
        %423 = vmatprep.subr.mxu0 0.0
        %424 = vmatpush1.msra.mxu0 0.0
        %425 = vmatprep.subr.mxu0 0.0
        %426 = vmatpush1.msra.mxu0 0.0
        %427 = vmatprep.subr.mxu0 0.0
        %428 = vmatpush1.msra.mxu0 0.0
        %429 = vmatprep.subr.mxu0 0.0
        %430 = vmatpush1.msra.mxu0 0.0
        %431 = vmatprep.subr.mxu0 0.0
        %432 = vmatpush1.msra.mxu0 0.0
        %433 = vmatprep.mubr.f32.mxu0 0.0
        %434 = vmatmul.mubr.f32.gmra.mrb[0].mxu0 %v367
        %v435 = vpop.f32.mrb[0].mxu0
        %v436 = vadd.f32 %v363, %v435
        %v437 = vpop.f32.mrb[0].mxu0
        %438 = vdwg.mxu0
        %v439 = vmax.f32 %v436, 0.0
        %v440 = vld [vmem:[%s3] sm:$0xff]
        %v441 = vld [vmem:[%s3 + $0x8] sm:$0xff]
        %v442 = vld [vmem:[%s3 + $0x10] sm:$0xff]
        %v443 = vld [vmem:[%s3 + $0x18] sm:$0xff]
        %v444 = vld [vmem:[%s3 + $0x20] sm:$0xff]
        %v445 = vld [vmem:[%s3 + $0x28] sm:$0xff]
        %v446 = vld [vmem:[%s3 + $0x30] sm:$0xff]
        %v447 = vld [vmem:[%s3 + $0x38] sm:$0xff]
        %v448 = vld [vmem:[%s4] sm:$0x1]
        %v450 = vlaneseq
        %v451 = vshrl.u32 %v450, 7
        %v452 = vsub.s32 0, %v451
        %v453 = vrot.slane %v448, %v452
        %vm455 = vcmask 523264
        %v457 = vsel %vm455, %v439, 0
        %459 = vmatprep.subr.mxu0 0.0
        %460 = vmatpush1.msra.mxu0 %v440
        %461 = vmatprep.subr.mxu0 0.0
        %462 = vmatpush1.msra.mxu0 %v441
        %463 = vmatprep.subr.mxu0 0.0
        %464 = vmatpush1.msra.mxu0 %v442
        %465 = vmatprep.subr.mxu0 0.0
        %466 = vmatpush1.msra.mxu0 %v443
        %467 = vmatprep.subr.mxu0 0.0
        %468 = vmatpush1.msra.mxu0 %v444
        %469 = vmatprep.subr.mxu0 0.0
        %470 = vmatpush1.msra.mxu0 %v445
        %471 = vmatprep.subr.mxu0 0.0
        %472 = vmatpush1.msra.mxu0 %v446
        %473 = vmatprep.subr.mxu0 0.0
        %474 = vmatpush1.msra.mxu0 %v447
        %475 = vmatprep.subr.mxu0 0.0
        %476 = vmatpush1.msra.mxu0 0.0
        %477 = vmatprep.subr.mxu0 0.0
        %478 = vmatpush1.msra.mxu0 0.0
        %479 = vmatprep.subr.mxu0 0.0
        %480 = vmatpush1.msra.mxu0 0.0
        %481 = vmatprep.subr.mxu0 0.0
        %482 = vmatpush1.msra.mxu0 0.0
        %483 = vmatprep.subr.mxu0 0.0
        %484 = vmatpush1.msra.mxu0 0.0
        %485 = vmatprep.subr.mxu0 0.0
        %486 = vmatpush1.msra.mxu0 0.0
        %487 = vmatprep.subr.mxu0 0.0
        %488 = vmatpush1.msra.mxu0 0.0
        %489 = vmatprep.subr.mxu0 0.0
        %490 = vmatpush1.msra.mxu0 0.0
        %491 = vmatprep.subr.mxu0 0.0
        %492 = vmatpush1.msra.mxu0 0.0
        %493 = vmatprep.subr.mxu0 0.0
        %494 = vmatpush1.msra.mxu0 0.0
        %495 = vmatprep.subr.mxu0 0.0
        %496 = vmatpush1.msra.mxu0 0.0
        %497 = vmatprep.subr.mxu0 0.0
        %498 = vmatpush1.msra.mxu0 0.0
        %499 = vmatprep.subr.mxu0 0.0
        %500 = vmatpush1.msra.mxu0 0.0
        %501 = vmatprep.subr.mxu0 0.0
        %502 = vmatpush1.msra.mxu0 0.0
        %503 = vmatprep.subr.mxu0 0.0
        %504 = vmatpush1.msra.mxu0 0.0
        %505 = vmatprep.subr.mxu0 0.0
        %506 = vmatpush1.msra.mxu0 0.0
        %507 = vmatprep.subr.mxu0 0.0
        %508 = vmatpush1.msra.mxu0 0.0
        %509 = vmatprep.subr.mxu0 0.0
        %510 = vmatpush1.msra.mxu0 0.0
        %511 = vmatprep.subr.mxu0 0.0
        %512 = vmatpush1.msra.mxu0 0.0
        %513 = vmatprep.subr.mxu0 0.0
        %514 = vmatpush1.msra.mxu0 0.0
        %515 = vmatprep.subr.mxu0 0.0
        %516 = vmatpush1.msra.mxu0 0.0
        %517 = vmatprep.subr.mxu0 0.0
        %518 = vmatpush1.msra.mxu0 0.0
        %519 = vmatprep.subr.mxu0 0.0
        %520 = vmatpush1.msra.mxu0 0.0
        %521 = vmatprep.subr.mxu0 0.0
        %522 = vmatpush1.msra.mxu0 0.0
        %523 = vmatprep.mubr.f32.mxu0 0.0
        %524 = vmatmul.mubr.f32.gmra.mrb[0].mxu0 %v457
        %v525 = vpop.f32.mrb[0].mxu0
        %v526 = vadd.f32 %v453, %v525
        %v527 = vpop.f32.mrb[0].mxu0
        %528 = vdwg.mxu0
        %v529 = vmax.f32 %v526, 0.0
        %v530 = vld [vmem:[%s5] sm:$0xff]
        %v531 = vld [vmem:[%s5 + $0x8] sm:$0xff]
        %v532 = vld [vmem:[%s5 + $0x10] sm:$0xff]
        %v533 = vld [vmem:[%s5 + $0x18] sm:$0xff]
        %v534 = vld [vmem:[%s5 + $0x20] sm:$0xff]
        %v535 = vld [vmem:[%s5 + $0x28] sm:$0xff]
        %v536 = vld [vmem:[%s5 + $0x30] sm:$0xff]
        %v537 = vld [vmem:[%s5 + $0x38] sm:$0xff]
        %v538 = vld [vmem:[#allocation2] sm:$0x1]
        %v540 = vlaneseq
        %v541 = vshrl.u32 %v540, 7
        %v542 = vsub.s32 0, %v541
        %v543 = vrot.slane %v538, %v542
        %v546 = vsel %vm455, %v529, 0
        %548 = vmatprep.subr.mxu0 0.0
        %549 = vmatpush1.msra.mxu0 %v530
        %550 = vmatprep.subr.mxu0 0.0
        %551 = vmatpush1.msra.mxu0 %v531
        %552 = vmatprep.subr.mxu0 0.0
        %553 = vmatpush1.msra.mxu0 %v532
        %554 = vmatprep.subr.mxu0 0.0
        %555 = vmatpush1.msra.mxu0 %v533
        %556 = vmatprep.subr.mxu0 0.0
        %557 = vmatpush1.msra.mxu0 %v534
        %558 = vmatprep.subr.mxu0 0.0
        %559 = vmatpush1.msra.mxu0 %v535
        %560 = vmatprep.subr.mxu0 0.0
        %561 = vmatpush1.msra.mxu0 %v536
        %562 = vmatprep.subr.mxu0 0.0
        %563 = vmatpush1.msra.mxu0 %v537
        %564 = vmatprep.subr.mxu0 0.0
        %565 = vmatpush1.msra.mxu0 0.0
        %566 = vmatprep.subr.mxu0 0.0
        %567 = vmatpush1.msra.mxu0 0.0
        %568 = vmatprep.subr.mxu0 0.0
        %569 = vmatpush1.msra.mxu0 0.0
        %570 = vmatprep.subr.mxu0 0.0
        %571 = vmatpush1.msra.mxu0 0.0
        %572 = vmatprep.subr.mxu0 0.0
        %573 = vmatpush1.msra.mxu0 0.0
        %574 = vmatprep.subr.mxu0 0.0
        %575 = vmatpush1.msra.mxu0 0.0
        %576 = vmatprep.subr.mxu0 0.0
        %577 = vmatpush1.msra.mxu0 0.0
        %578 = vmatprep.subr.mxu0 0.0
        %579 = vmatpush1.msra.mxu0 0.0
        %580 = vmatprep.subr.mxu0 0.0
        %581 = vmatpush1.msra.mxu0 0.0
        %582 = vmatprep.subr.mxu0 0.0
        %583 = vmatpush1.msra.mxu0 0.0
        %584 = vmatprep.subr.mxu0 0.0
        %585 = vmatpush1.msra.mxu0 0.0
        %586 = vmatprep.subr.mxu0 0.0
        %587 = vmatpush1.msra.mxu0 0.0
        %588 = vmatprep.subr.mxu0 0.0
        %589 = vmatpush1.msra.mxu0 0.0
        %590 = vmatprep.subr.mxu0 0.0
        %591 = vmatpush1.msra.mxu0 0.0
        %592 = vmatprep.subr.mxu0 0.0
        %593 = vmatpush1.msra.mxu0 0.0
        %594 = vmatprep.subr.mxu0 0.0
        %595 = vmatpush1.msra.mxu0 0.0
        %596 = vmatprep.subr.mxu0 0.0
        %597 = vmatpush1.msra.mxu0 0.0
        %598 = vmatprep.subr.mxu0 0.0
        %599 = vmatpush1.msra.mxu0 0.0
        %600 = vmatprep.subr.mxu0 0.0
        %601 = vmatpush1.msra.mxu0 0.0
        %602 = vmatprep.subr.mxu0 0.0
        %603 = vmatpush1.msra.mxu0 0.0
        %604 = vmatprep.subr.mxu0 0.0
        %605 = vmatpush1.msra.mxu0 0.0
        %606 = vmatprep.subr.mxu0 0.0
        %607 = vmatpush1.msra.mxu0 0.0
        %608 = vmatprep.subr.mxu0 0.0
        %609 = vmatpush1.msra.mxu0 0.0
        %610 = vmatprep.subr.mxu0 0.0
        %611 = vmatpush1.msra.mxu0 0.0
        %612 = vmatprep.mubr.f32.mxu0 0.0
        %613 = vmatmul.mubr.f32.gmra.mrb[0].mxu0 %v546
        %v614 = vpop.f32.mrb[0].mxu0
        %v615 = vadd.f32 %v543, %v614
        %v616 = vpop.f32.mrb[0].mxu0
        %617 = vdwg.mxu0
        %v618 = vld [vmem:[%s307] sm:$0xff]
        %v619 = vmul.f32 %v615, 0.5
        %v620 = vmul.f32 %v619, 1.442695
        %v621 = vpow.pop %v620
        %623 = vrot.lane.b32.xlu0 %v621, 112
        %v624 = vpop.permute.xlu0 %623
        %v626 = vmul.f32 %v618, %v624
        %v627 = vadd.f32 %v615, %v626
        %628 = vrot.lane.b32.xlu0 %v529, 64
        %v629 = vpop.permute.xlu0 %628
        %v631 = vsel %vm455, %v439, %v629
        %633 = vrot.lane.b32.xlu0 %v627, 32
        %v634 = vpop.permute.xlu0 %633
        %v636 = vsel %vm365, %v615, %v634
        %vm637 = vcmask 392192
        %v638 = vsel %vm637, %v636, 0.0
        %639 = vst [vmem:[%s352] sm:$0xff] %v631
        %640 = vst [vmem:[%s352 + $0x8] sm:$0xff] %v638
        %p641 = scmp.lt.s32.totalorder %s23, 1
        %s642 = scalar_select %p641, %s23, 1
        %s643 = smul.addr %s642, 2
        %s644 = smul.addr %s643, 8
        %s645 = scalar_lea.vmem %s8, %s644
        // Predicated region
        $region61: #{encoder_forward.1} parent=51 // pred_check
          %p646 = pneg %p219
        $region62: #{encoder_forward.1} parent=51 // pred_check_branch
          %648 = sbr.rel (%p646) target = $region64
        $region63: #{encoder_forward.1} parent=51 // pred_region
          _
        $region64: #{encoder_forward.1} parent=51 // pred_fallthru
          _
      $region52: #{encoder_forward.1} parent=5 // pred_fallthru
        _
      %p649 = scmp.le.s32.totalorder 2, %s18
      // Predicated region
      $region65: #{encoder_forward.1} parent=5 // pred_check
        %p650 = pneg %p649
      $region66: #{encoder_forward.1} parent=5 // pred_check_branch
        %652 = sbr.rel (%p650) target = $region68
      $region67: #{encoder_forward.1} parent=5 // pred_region
        %s653 = ssub.s32 %s18, 2
        // Predicated region
        $region69: #{encoder_forward.1} parent=67 // pred_check
          %p654 = pneg %p225
        $region70: #{encoder_forward.1} parent=67 // pred_check_branch
          %656 = sbr.rel (%p654) target = $region72
        $region71: #{encoder_forward.1} parent=67 // pred_region
          %p657 = scmp.lt.s32.totalorder %s24, 1
          %s658 = scalar_select %p657, %s24, 1
          %s659 = smul.addr %s658, 2
          %s660 = smul.addr %s659, 8
          %s661 = scalar_lea.vmem %s8, %s660
        $region72: #{encoder_forward.1} parent=67 // pred_fallthru
          _
      $region68: #{encoder_forward.1} parent=5 // pred_fallthru
        _
    $region6: #{encoder_forward.1} parent=1 // loop_footer
      %s22 = sadd.s32 1, %s18
    $region7: #{encoder_forward.1} parent=1 // loop_footer_branch
      %17 = sbr.rel target = $region3
    $region8: #{encoder_forward.1} parent=1 // loop_exit
      _
    %662 = vsyncpa [#allocation3], 1
    %s663 = scalar_lea.sflag [#allocation3], 1
    %664 = vsyncpa %s663, 1
    %665 = vsyncpa [#allocation5], 1
    %s666 = scalar_lea.sflag [#allocation5], 1
    %667 = vsyncpa %s666, 1

</llo_original>
